<compile_context>
chip_gen: v5e
topology: v5e:2x2
jax: 0.10.0
libtpu: 0.0.40
codegen_flags: <defaults>
</compile_context>

<pallas_src>
import jax
import jax.numpy as jnp
from jax.experimental import pallas as pl
from jax.experimental.pallas import tpu as pltpu


def _round_up(x, m):
    return ((x + m - 1) // m) * m


def _cdiv(a, b):
    return (a + b - 1) // b


def _vmem_budget_bytes():
    """~75% of the local chip's physical VMEM (per TensorCore).  Conservative
    fallback is sized for v7x (64 MiB) so the limit is always physically valid."""
    try:
        cap = int(pltpu.get_tpu_info().vmem_capacity_bytes)
    except Exception:
        cap = 64 * 1024 * 1024
    return (cap * 3) // 4


def _entity_model_kernel(x_ref, w1t_ref, b1_ref, w2e_ref, b2e_ref, o_ref, h_ref):
    # fc1 is computed once per batch tile (inner grid axis j streams entity tiles);
    # the bf16 activation is kept in VMEM scratch and reused for every j.
    @pl.when(pl.program_id(1) == 0)
    def _():
        h = jnp.dot(x_ref[...].astype(w1t_ref.dtype), w1t_ref[...],
                    preferred_element_type=jnp.float32)
        h_ref[...] = jnp.maximum(h + b1_ref[...], 0.0).astype(h_ref.dtype)

    # Fused (fc2 + entity projection): h @ (W2^T @ entity^T) + (b2 @ entity^T)
    y = jnp.dot(h_ref[...], w2e_ref[...], preferred_element_type=jnp.float32)
    o_ref[...] = (y + b2e_ref[...]).astype(o_ref.dtype)


def prepare_entity_params(w1, b1, w2, b2, entity, *, compute_dtype=jnp.bfloat16):
    """One-time parameter prep (keep OUT of the per-step hot path):
       pre-transpose fc1, fuse fc2 with the entity table, cast MXU operands to bf16,
       and pad the entity dimension to a lane-dense tile multiple."""
    f_out = w1.shape[0]
    E = entity.shape[0]
    bpe = jnp.dtype(compute_dtype).itemsize

    # Decide whether the fused weight stays fully VMEM-resident (tn == e_pad) or
    # must be streamed in lane tiles of tn=512 (multiple of the 256-wide MXU).
    resident_limit = _vmem_budget_bytes() // 3
    e_lane = _round_up(E, 128)
    tn = e_lane if f_out * e_lane * bpe <= resident_limit else 512
    e_pad = _round_up(E, tn)

    w1t = w1.T.astype(compute_dtype)                                  # [F_in, F_out]
    b1_2d = b1.reshape(1, f_out).astype(jnp.float32)                  # [1, F_out]

    ent_t = entity.T.astype(jnp.float32)                              # [F_out, E]
    w2e = w2.T.astype(jnp.float32) @ ent_t                            # [F_out, E]
    b2e = b2.astype(jnp.float32) @ ent_t                              # [E]

    # TODO(synk): bf16-casting the fused product can lose dynamic range vs. the
    # unfused 3-matmul path; re-validate tolerance on trained weights (or keep w2e
    # in f32 at 2x the VMEM / DMA cost).
    w2e = jnp.pad(w2e, ((0, 0), (0, e_pad - E))).astype(compute_dtype)  # [F_out, E_pad]
    b2e = jnp.pad(b2e, (0, e_pad - E)).reshape(1, e_pad).astype(jnp.float32)

    return dict(w1t=w1t, b1=b1_2d, w2e=w2e, b2e=b2e, n_entities=E, tn=int(tn))


def entity_model_forward_prepared(x, params, *, tm=None, out_dtype=jnp.float32,
                                  single_buffer_constants=None):
    """x: [B, F_in] -> [B, E] (== torch forward after .squeeze(), for B > 1).

    For repeated inference wrap this in jax.jit and pass single_buffer_constants
    explicitly (True/False); the None default auto-detects support eagerly."""
    B, f_in = x.shape
    w1t, b1, w2e, b2e = params["w1t"], params["b1"], params["w2e"], params["b2e"]
    f_out = w1t.shape[1]
    e_pad = w2e.shape[1]
    tn = params["tn"]
    E = params["n_entities"]
    nn = e_pad // tn
    cdt = w1t.dtype
    bpe = jnp.dtype(cdt).itemsize
    x_bpe = jnp.dtype(x.dtype).itemsize

    vmem_budget = _vmem_budget_bytes()

    # Resident weight bytes (constants single-buffered; streamed w2e double-buffered).
    w2e_bufs = 1 if nn == 1 else 2
    weight_bytes = (f_in * f_out * bpe + f_out * 4
                    + w2e_bufs * (f_out * tn * bpe + tn * 4))
    # Per-batch-row VMEM: double-buffered x tile, double-buffered bf16 out tile,
    # plus the single bf16 h-scratch row.
    row_bytes = 2 * f_in * x_bpe + 2 * tn * 2 + f_out * bpe

    if tm is None:
        headroom = 4 * 1024 * 1024
        fit = max(16, (vmem_budget - weight_bytes - headroom) // max(row_bytes, 1))
        tm_cap = max(16, int(min(512, (fit // 16) * 16)))
        if B <= tm_cap:
            tm = B                                    # single tile, no batch padding
        else:
            n_bt = _cdiv(B, tm_cap)                   # balance tiles -> minimal pad
            tm = _round_up(_cdiv(B, n_bt), 16)
    nb = _cdiv(B, tm)
    b_pad = nb * tm

    x_p = x
    if b_pad != B:
        # Only awkward batch sizes pay this (small) pad; under jax.jit it fuses
        # with x's producer.
        x_p = jnp.pad(x, ((0, b_pad - B), (0, 0)))

    # Explicit VMEM limit: actual need + margin (covers the double-buffered
    # fallback path and Mosaic-internal scratch), capped at ~75% of physical VMEM.
    need = weight_bytes + tm * row_bytes
    extra_if_double = (f_in * f_out * bpe + f_out * 4
                       + ((f_out * tn * bpe + tn * 4) if nn == 1 else 0))
    vmem_limit = int(min(vmem_budget,
                         max(4 * 1024 * 1024,
                             need + need // 2 + extra_if_double + (2 << 20))))

    def run(single_buffer):
        const_kw = dict(pipeline_mode=pl.Buffered(1)) if single_buffer else {}
        resident_kw = const_kw if nn == 1 else {}
        grid_spec = pltpu.PrefetchScalarGridSpec(
            num_scalar_prefetch=0,
            grid=(nb, nn),
            in_specs=[
                pl.BlockSpec((tm, f_in), lambda i, j: (i, 0)),               # x tile
                pl.BlockSpec((f_in, f_out), lambda i, j: (0, 0), **const_kw),  # w1^T
                pl.BlockSpec((1, f_out), lambda i, j: (0, 0), **const_kw),     # b1
                pl.BlockSpec((f_out, tn), lambda i, j: (0, j), **resident_kw),  # fused w2*entity^T
                pl.BlockSpec((1, tn), lambda i, j: (0, j), **resident_kw),      # fused bias
            ],
            out_specs=pl.BlockSpec((tm, tn), lambda i, j: (i, j)),
            scratch_shapes=[pltpu.VMEM((tm, f_out), cdt)],                   # h scratch
        )
        return pl.pallas_call(
            _entity_model_kernel,
            out_shape=jax.ShapeDtypeStruct((b_pad, e_pad), jnp.bfloat16),
            grid_spec=grid_spec,
            compiler_params=pltpu.CompilerParams(
                # Batch axis parallel (megacore / v7x 2-TC sharding); entity-tile
                # axis is serial because it carries the h scratch.
                dimension_semantics=("parallel", "arbitrary"),
                vmem_limit_bytes=vmem_limit,
            ),
        )(x_p, w1t, b1, w2e, b2e)

    if single_buffer_constants is None:
        try:
            out = run(True)
        except Exception:
            # Fallback for JAX versions without pipeline_mode=pl.Buffered(1)
            # support on grid-constant operands: default double buffering.
            out = run(False)
    else:
        out = run(bool(single_buffer_constants))

    out = out[:B, :E]                       # strip batch + lane padding (bf16)
    if out_dtype is not None and out.dtype != jnp.dtype(out_dtype):
        out = out.astype(out_dtype)
    return out


def entity_model_forward(x, w1, b1, w2, b2, entity, *, out_dtype=jnp.float32):
    """Convenience wrapper taking torch-layout params: w1/w2 [F_out, F_in],
    b1/b2 [F_out], entity [E, F_out].  Returns [B, E].
    NOTE: re-runs the one-time prep (F^2*E fusion matmul) every call; for repeated
    inference call prepare_entity_params() once and reuse the prepared forward."""
    params = prepare_entity_params(w1, b1, w2, b2, entity)
    return entity_model_forward_prepared(x, params, out_dtype=out_dtype)


def _torch_style_linear_init(key, out_features, in_features):
    """nn.Linear default init: U(-1/sqrt(fan_in), 1/sqrt(fan_in)) for W and b."""
    kw, kb = jax.random.split(key)
    bound = 1.0 / jnp.sqrt(jnp.float32(in_features))
    w = jax.random.uniform(kw, (out_features, in_features), jnp.float32, -bound, bound)
    b = jax.random.uniform(kb, (out_features,), jnp.float32, -bound, bound)
    return w, b


if __name__ == "__main__":
    # Small shapes consistent with the module: fc2 consumes fc1's output -> F_in == F_out.
    B = 2     # batch
    F = 32    # in_features == out_features
    E = 8     # number of entities (rows of the `entity` table)

    key = jax.random.PRNGKey(0)
    k_ent, k_fc1, k_fc2, k_x = jax.random.split(key, 4)

    entity = jax.random.normal(k_ent, (E, F), jnp.float32)   # [E, F_out]
    w1, b1 = _torch_style_linear_init(k_fc1, F, F)           # fc1
    w2, b2 = _torch_style_linear_init(k_fc2, F, F)           # fc2
    x = jax.random.normal(k_x, (B, F), jnp.float32)

    # TODO(synk): for B == 1 torch's .squeeze() would also drop the batch dim; this
    # wrapper always returns [B, E].
    params = prepare_entity_params(w1, b1, w2, b2, entity)   # one-time prep
    out = entity_model_forward_prepared(x, params)
    out = jax.block_until_ready(out)

    # Pure-JAX f32 reference (same math as the PyTorch forward, B > 1 branch).
    h_ref = jnp.maximum(x @ w1.T + b1, 0.0)
    ref = (h_ref @ w2.T + b2) @ entity.T

    assert out.shape == (B, E)
    # bf16 MXU operands / bf16 output with f32 accumulation -> ~1e-2 error budget.
    rel_err = jnp.max(jnp.abs(out - ref)) / (jnp.max(jnp.abs(ref)) + 1e-6)
    assert rel_err < 3e-2, f"relative error too large: {rel_err}"

    print("KERNEL_OK")
</pallas_src>

<mosaic_0001>
module attributes {stable_mosaic.version = 11 : i64} {
  func.func @_entity_model_kernel(%arg0: i32, %arg1: i32, %arg2: memref<2x32xf32, #tpu.memory_space<vmem>>, %arg3: memref<32x32xbf16, #tpu.memory_space<vmem>>, %arg4: memref<1x32xf32, #tpu.memory_space<vmem>>, %arg5: memref<32x128xbf16, #tpu.memory_space<vmem>>, %arg6: memref<1x128xf32, #tpu.memory_space<vmem>>, %arg7: memref<2x128xbf16, #tpu.memory_space<vmem>>, %arg8: memref<2x32xbf16, #tpu.memory_space<vmem>>) attributes {dimension_semantics = [#tpu.dimension_semantics<parallel>, #tpu.dimension_semantics<arbitrary>], iteration_bounds = array<i64: 1, 1>, scalar_prefetch = 0 : i64, scratch_operands = 1 : i64, tpu.core_type = #tpu.core_type<tc>, window_params = [{transform_indices = @transform_0, window_bounds = array<i64: 2, 32>}, {pipeline_mode = #tpu.pipeline_mode<synchronous>, transform_indices = @transform_1, window_bounds = array<i64: 32, 32>}, {pipeline_mode = #tpu.pipeline_mode<synchronous>, transform_indices = @transform_2, window_bounds = array<i64: 1, 32>}, {pipeline_mode = #tpu.pipeline_mode<synchronous>, transform_indices = @transform_3, window_bounds = array<i64: 32, 128>}, {pipeline_mode = #tpu.pipeline_mode<synchronous>, transform_indices = @transform_4, window_bounds = array<i64: 1, 128>}, {transform_indices = @transform_5, window_bounds = array<i64: 2, 128>}]} {
    %c0_i32 = arith.constant 0 : i32
    %0 = arith.cmpi eq, %arg1, %c0_i32 : i32
    %1 = arith.extui %0 : i1 to i32
    %c0_i32_0 = arith.constant 0 : i32
    %2 = arith.cmpi ne, %1, %c0_i32_0 : i32
    scf.if %2 {
      %c0_8 = arith.constant 0 : index
      %c0_9 = arith.constant 0 : index
      %11 = vector.load %arg2[%c0_8, %c0_9] : memref<2x32xf32, #tpu.memory_space<vmem>>, vector<2x32xf32>
      %12 = arith.truncf %11 : vector<2x32xf32> to vector<2x32xbf16>
      %c0_10 = arith.constant 0 : index
      %c0_11 = arith.constant 0 : index
      %13 = vector.load %arg3[%c0_10, %c0_11] : memref<32x32xbf16, #tpu.memory_space<vmem>>, vector<32x32xbf16>
      %cst_12 = arith.constant dense<0.000000e+00> : vector<2x32xf32>
      %14 = tpu.matmul %12, %13, %cst_12 {dimension_numbers = #tpu.dot_dimension_numbers<[1], [0], [0], [1], [0, 0, 1, 1], [], []>} : vector<2x32xbf16>, vector<32x32xbf16>, vector<2x32xf32> -> vector<2x32xf32>
      %c0_13 = arith.constant 0 : index
      %c0_14 = arith.constant 0 : index
      %15 = vector.load %arg4[%c0_13, %c0_14] : memref<1x32xf32, #tpu.memory_space<vmem>>, vector<1x32xf32>
      %16 = vector.broadcast %15 : vector<1x32xf32> to vector<2x32xf32>
      %17 = arith.addf %14, %16 : vector<2x32xf32>
      %cst_15 = arith.constant 0.000000e+00 : f32
      %18 = vector.broadcast %cst_15 : f32 to vector<2x32xf32>
      %19 = arith.maximumf %17, %18 : vector<2x32xf32>
      %20 = arith.truncf %19 : vector<2x32xf32> to vector<2x32xbf16>
      %c0_16 = arith.constant 0 : index
      %c0_17 = arith.constant 0 : index
      %21 = vector.load %arg8[%c0_16, %c0_17] : memref<2x32xbf16, #tpu.memory_space<vmem>>, vector<2x32xbf16>
      tpu.vector_store %arg8[%c0_16, %c0_17], %20 {strides = array<i32>} : memref<2x32xbf16, #tpu.memory_space<vmem>>, vector<2x32xbf16>,
    } else {
    }
    %c0 = arith.constant 0 : index
    %c0_1 = arith.constant 0 : index
    %3 = vector.load %arg8[%c0, %c0_1] : memref<2x32xbf16, #tpu.memory_space<vmem>>, vector<2x32xbf16>
    %c0_2 = arith.constant 0 : index
    %c0_3 = arith.constant 0 : index
    %4 = vector.load %arg5[%c0_2, %c0_3] : memref<32x128xbf16, #tpu.memory_space<vmem>>, vector<32x128xbf16>
    %cst = arith.constant dense<0.000000e+00> : vector<2x128xf32>
    %5 = tpu.matmul %3, %4, %cst {dimension_numbers = #tpu.dot_dimension_numbers<[1], [0], [0], [1], [0, 0, 1, 1], [], []>} : vector<2x32xbf16>, vector<32x128xbf16>, vector<2x128xf32> -> vector<2x128xf32>
    %c0_4 = arith.constant 0 : index
    %c0_5 = arith.constant 0 : index
    %6 = vector.load %arg6[%c0_4, %c0_5] : memref<1x128xf32, #tpu.memory_space<vmem>>, vector<1x128xf32>
    %7 = vector.broadcast %6 : vector<1x128xf32> to vector<2x128xf32>
    %8 = arith.addf %5, %7 : vector<2x128xf32>
    %9 = arith.truncf %8 : vector<2x128xf32> to vector<2x128xbf16>
    %c0_6 = arith.constant 0 : index
    %c0_7 = arith.constant 0 : index
    %10 = vector.load %arg7[%c0_6, %c0_7] : memref<2x128xbf16, #tpu.memory_space<vmem>>, vector<2x128xbf16>
    tpu.vector_store %arg7[%c0_6, %c0_7], %9 {strides = array<i32>} : memref<2x128xbf16, #tpu.memory_space<vmem>>, vector<2x128xbf16>,
    return
  }
  func.func @transform_0(%arg0: i32, %arg1: i32) -> (i32, i32) {
    %c0_i32 = arith.constant 0 : i32
    %c0_i32_0 = arith.constant 0 : i32
    return %arg0, %c0_i32 : i32, i32
  }
  func.func @transform_1(%arg0: i32, %arg1: i32) -> (i32, i32) {
    %c0_i32 = arith.constant 0 : i32
    %c0_i32_0 = arith.constant 0 : i32
    %c0_i32_1 = arith.constant 0 : i32
    return %c0_i32, %c0_i32_0 : i32, i32
  }
  func.func @transform_2(%arg0: i32, %arg1: i32) -> (i32, i32) {
    %c0_i32 = arith.constant 0 : i32
    %c0_i32_0 = arith.constant 0 : i32
    %c0_i32_1 = arith.constant 0 : i32
    return %c0_i32, %c0_i32_0 : i32, i32
  }
  func.func @transform_3(%arg0: i32, %arg1: i32) -> (i32, i32) {
    %c0_i32 = arith.constant 0 : i32
    %c0_i32_0 = arith.constant 0 : i32
    return %c0_i32, %arg1 : i32, i32
  }
  func.func @transform_4(%arg0: i32, %arg1: i32) -> (i32, i32) {
    %c0_i32 = arith.constant 0 : i32
    %c0_i32_0 = arith.constant 0 : i32
    return %c0_i32, %arg1 : i32, i32
  }
  func.func @transform_5(%arg0: i32, %arg1: i32) -> (i32, i32) {
    %c0_i32 = arith.constant 0 : i32
    return %arg0, %arg1 : i32, i32
  }
}

module attributes {stable_mosaic.version = 11 : i64} {
  func.func @_entity_model_kernel(%arg0: i32, %arg1: i32, %arg2: memref<2x32xf32, #tpu.memory_space<vmem>>, %arg3: memref<32x32xbf16, #tpu.memory_space<vmem>>, %arg4: memref<1x32xf32, #tpu.memory_space<vmem>>, %arg5: memref<32x128xbf16, #tpu.memory_space<vmem>>, %arg6: memref<1x128xf32, #tpu.memory_space<vmem>>, %arg7: memref<2x128xbf16, #tpu.memory_space<vmem>>, %arg8: memref<2x32xbf16, #tpu.memory_space<vmem>>) attributes {dimension_semantics = [#tpu.dimension_semantics<parallel>, #tpu.dimension_semantics<arbitrary>], iteration_bounds = array<i64: 1, 1>, scalar_prefetch = 0 : i64, scratch_operands = 1 : i64, tpu.core_type = #tpu.core_type<tc>, window_params = [{transform_indices = @transform_0, window_bounds = array<i64: 2, 32>}, {pipeline_mode = #tpu.pipeline_mode<synchronous>, transform_indices = @transform_1, window_bounds = array<i64: 32, 32>}, {pipeline_mode = #tpu.pipeline_mode<synchronous>, transform_indices = @transform_2, window_bounds = array<i64: 1, 32>}, {transform_indices = @transform_3, window_bounds = array<i64: 32, 128>}, {transform_indices = @transform_4, window_bounds = array<i64: 1, 128>}, {transform_indices = @transform_5, window_bounds = array<i64: 2, 128>}]} {
    %c0_i32 = arith.constant 0 : i32
    %0 = arith.cmpi eq, %arg1, %c0_i32 : i32
    %1 = arith.extui %0 : i1 to i32
    %c0_i32_0 = arith.constant 0 : i32
    %2 = arith.cmpi ne, %1, %c0_i32_0 : i32
    scf.if %2 {
      %c0_8 = arith.constant 0 : index
      %c0_9 = arith.constant 0 : index
      %11 = vector.load %arg2[%c0_8, %c0_9] : memref<2x32xf32, #tpu.memory_space<vmem>>, vector<2x32xf32>
      %12 = arith.truncf %11 : vector<2x32xf32> to vector<2x32xbf16>
      %c0_10 = arith.constant 0 : index
      %c0_11 = arith.constant 0 : index
      %13 = vector.load %arg3[%c0_10, %c0_11] : memref<32x32xbf16, #tpu.memory_space<vmem>>, vector<32x32xbf16>
      %cst_12 = arith.constant dense<0.000000e+00> : vector<2x32xf32>
      %14 = tpu.matmul %12, %13, %cst_12 {dimension_numbers = #tpu.dot_dimension_numbers<[1], [0], [0], [1], [0, 0, 1, 1], [], []>} : vector<2x32xbf16>, vector<32x32xbf16>, vector<2x32xf32> -> vector<2x32xf32>
      %c0_13 = arith.constant 0 : index
      %c0_14 = arith.constant 0 : index
      %15 = vector.load %arg4[%c0_13, %c0_14] : memref<1x32xf32, #tpu.memory_space<vmem>>, vector<1x32xf32>
      %16 = vector.broadcast %15 : vector<1x32xf32> to vector<2x32xf32>
      %17 = arith.addf %14, %16 : vector<2x32xf32>
      %cst_15 = arith.constant 0.000000e+00 : f32
      %18 = vector.broadcast %cst_15 : f32 to vector<2x32xf32>
      %19 = arith.maximumf %17, %18 : vector<2x32xf32>
      %20 = arith.truncf %19 : vector<2x32xf32> to vector<2x32xbf16>
      %c0_16 = arith.constant 0 : index
      %c0_17 = arith.constant 0 : index
      %21 = vector.load %arg8[%c0_16, %c0_17] : memref<2x32xbf16, #tpu.memory_space<vmem>>, vector<2x32xbf16>
      tpu.vector_store %arg8[%c0_16, %c0_17], %20 {strides = array<i32>} : memref<2x32xbf16, #tpu.memory_space<vmem>>, vector<2x32xbf16>,
    } else {
    }
    %c0 = arith.constant 0 : index
    %c0_1 = arith.constant 0 : index
    %3 = vector.load %arg8[%c0, %c0_1] : memref<2x32xbf16, #tpu.memory_space<vmem>>, vector<2x32xbf16>
    %c0_2 = arith.constant 0 : index
    %c0_3 = arith.constant 0 : index
    %4 = vector.load %arg5[%c0_2, %c0_3] : memref<32x128xbf16, #tpu.memory_space<vmem>>, vector<32x128xbf16>
    %cst = arith.constant dense<0.000000e+00> : vector<2x128xf32>
    %5 = tpu.matmul %3, %4, %cst {dimension_numbers = #tpu.dot_dimension_numbers<[1], [0], [0], [1], [0, 0, 1, 1], [], []>} : vector<2x32xbf16>, vector<32x128xbf16>, vector<2x128xf32> -> vector<2x128xf32>
    %c0_4 = arith.constant 0 : index
    %c0_5 = arith.constant 0 : index
    %6 = vector.load %arg6[%c0_4, %c0_5] : memref<1x128xf32, #tpu.memory_space<vmem>>, vector<1x128xf32>
    %7 = vector.broadcast %6 : vector<1x128xf32> to vector<2x128xf32>
    %8 = arith.addf %5, %7 : vector<2x128xf32>
    %9 = arith.truncf %8 : vector<2x128xf32> to vector<2x128xbf16>
    %c0_6 = arith.constant 0 : index
    %c0_7 = arith.constant 0 : index
    %10 = vector.load %arg7[%c0_6, %c0_7] : memref<2x128xbf16, #tpu.memory_space<vmem>>, vector<2x128xbf16>
    tpu.vector_store %arg7[%c0_6, %c0_7], %9 {strides = array<i32>} : memref<2x128xbf16, #tpu.memory_space<vmem>>, vector<2x128xbf16>,
    return
  }
  func.func @transform_0(%arg0: i32, %arg1: i32) -> (i32, i32) {
    %c0_i32 = arith.constant 0 : i32
    %c0_i32_0 = arith.constant 0 : i32
    return %arg0, %c0_i32 : i32, i32
  }
  func.func @transform_1(%arg0: i32, %arg1: i32) -> (i32, i32) {
    %c0_i32 = arith.constant 0 : i32
    %c0_i32_0 = arith.constant 0 : i32
    %c0_i32_1 = arith.constant 0 : i32
    return %c0_i32, %c0_i32_0 : i32, i32
  }
  func.func @transform_2(%arg0: i32, %arg1: i32) -> (i32, i32) {
    %c0_i32 = arith.constant 0 : i32
    %c0_i32_0 = arith.constant 0 : i32
    %c0_i32_1 = arith.constant 0 : i32
    return %c0_i32, %c0_i32_0 : i32, i32
  }
  func.func @transform_3(%arg0: i32, %arg1: i32) -> (i32, i32) {
    %c0_i32 = arith.constant 0 : i32
    %c0_i32_0 = arith.constant 0 : i32
    return %c0_i32, %arg1 : i32, i32
  }
  func.func @transform_4(%arg0: i32, %arg1: i32) -> (i32, i32) {
    %c0_i32 = arith.constant 0 : i32
    %c0_i32_0 = arith.constant 0 : i32
    return %c0_i32, %arg1 : i32, i32
  }
  func.func @transform_5(%arg0: i32, %arg1: i32) -> (i32, i32) {
    %c0_i32 = arith.constant 0 : i32
    return %arg0, %arg1 : i32, i32
  }
}

</mosaic_0001>

<llo_original>
// kernel: tpu_custom_call.1
$region0: #{tpu_custom_call.1}
  #allocation0 [shape = 'u32[]', space=smem, size = 0x4, offset = 0x4, fixed_abs, tag = 'smem constant byte address 0x4 - core index']
  #allocation1 [shape = 'u32[72,128]{1,0:T(1,128)}', space=vmem, size = 0x9000, scoped, tag = 'internal scratch']
  #allocation2 [shape = 'bf16[2,32]{1,0:T(2,128)(2,1)}', space=vmem, size = 0x200, scoped, tag = 'scratch operand']
  %s0 = inlined_call_operand.hbm [shape: f32[2,32], index: 0, kind: input, shape index: {}]
  %s1 = inlined_call_operand.hbm [shape: bf16[32,32], index: 1, kind: input, shape index: {}]
  %s2 = inlined_call_operand.vmem [shape: f32[1,32], index: 2, kind: input, shape index: {}]
  %s3 = inlined_call_operand.hbm [shape: bf16[32,128], index: 3, kind: input, shape index: {}]
  %s4 = inlined_call_operand.vmem [shape: f32[1,128], index: 4, kind: input, shape index: {}]
  %s5 = inlined_call_operand.hbm [shape: bf16[2,128], index: 5, kind: output, shape index: {}]
  %s6 = sld [smem:[#allocation0]]
  $region46: #{tpu_custom_call.1} parent=0
    _
  %s8 = ssub.s32 1, %s6
  %s9 = scalar_select 0, %s8, %s6
  $region1: #{tpu_custom_call.1} parent=0
    #allocation3 [shape = 'u8[1024]{0}', space=vmem, size = 0x400, scoped, tag = 'input window, operand 0, single buffered']
    #allocation4 [shape = 's32[1]{0}', space=sflag, size = 0x4, scoped, tag = 'scoped memory for tpu_custom_call.1']
    #allocation5 [shape = 's32[1]{0}', space=sflag, size = 0x4, scoped, tag = 'scoped memory for tpu_custom_call.1']
    #allocation6 [shape = 'u8[8192]{0}', space=vmem, size = 0x2000, scoped, tag = 'input window, operand 1, single buffered']
    #allocation7 [shape = 's32[1]{0}', space=sflag, size = 0x4, scoped, tag = 'scoped memory for tpu_custom_call.1']
    #allocation8 [shape = 'u8[8192]{0}', space=vmem, size = 0x2000, scoped, tag = 'input window, operand 3, single buffered']
    #allocation9 [shape = 'u8[512]{0}', space=vmem, size = 0x400, scoped, tag = 'output window, operand 0, single buffered']
    %10 = vsyncpa [#allocation4], 0
    %11 = vsyncpa [#allocation7], 0
    %12 = vsyncpa [#allocation5], 0
    // Predicated region
    $region2: #{tpu_custom_call.1} parent=1 // pred_check
      _
    $region3: #{tpu_custom_call.1} parent=1 // pred_check_branch
      %14 = sbr.rel (0) target = $region5
    $region4: #{tpu_custom_call.1} parent=1 // pred_region
      %16 = vsyncadd [#allocation4], 0
      %s18 = sshll.u32 %s0, 4
      %s19 = int_to_ptr.hbm [resolvable:$true] %s18
      %s20 = sshll.u32 [#allocation3], 4
      %s21 = int_to_ptr.vmem [resolvable:$true] %s20
      %23 = dma.hbm_to_vmem [thread:$0]  %s19, 32, %s21, [#allocation4]
    $region5: #{tpu_custom_call.1} parent=1 // pred_fallthru
      _
    // Predicated region
    $region6: #{tpu_custom_call.1} parent=1 // pred_check
      _
    $region7: #{tpu_custom_call.1} parent=1 // pred_check_branch
      %25 = sbr.rel (0) target = $region9
    $region8: #{tpu_custom_call.1} parent=1 // pred_region
      %27 = vsyncadd [#allocation7], 0
      %s28 = sshll.u32 %s1, 4
      %s29 = int_to_ptr.hbm [resolvable:$true] %s28
      %s30 = sshll.u32 [#allocation6], 4
      %s31 = int_to_ptr.vmem [resolvable:$true] %s30
      %36 = dma.hbm_to_vmem [thread:$0]  %s29, 256, %s31, [#allocation7], 64, 64, 4
    $region9: #{tpu_custom_call.1} parent=1 // pred_fallthru
      _
    // Predicated region
    $region10: #{tpu_custom_call.1} parent=1 // pred_check
      _
    $region11: #{tpu_custom_call.1} parent=1 // pred_check_branch
      %38 = sbr.rel (0) target = $region13
    $region12: #{tpu_custom_call.1} parent=1 // pred_region
      _
    $region13: #{tpu_custom_call.1} parent=1 // pred_fallthru
      _
    // Predicated region
    $region14: #{tpu_custom_call.1} parent=1 // pred_check
      _
    $region15: #{tpu_custom_call.1} parent=1 // pred_check_branch
      %40 = sbr.rel (0) target = $region17
    $region16: #{tpu_custom_call.1} parent=1 // pred_region
      %42 = vsyncadd [#allocation7], 0
      %s43 = sshll.u32 %s3, 4
      %s44 = int_to_ptr.hbm [resolvable:$true] %s43
      %s45 = sshll.u32 [#allocation8], 4
      %s46 = int_to_ptr.vmem [resolvable:$true] %s45
      %51 = dma.hbm_to_vmem [thread:$0]  %s44, 256, %s46, [#allocation7], 64, 64, 4
    $region17: #{tpu_custom_call.1} parent=1 // pred_fallthru
      _
    // Predicated region
    $region18: #{tpu_custom_call.1} parent=1 // pred_check
      _
    $region19: #{tpu_custom_call.1} parent=1 // pred_check_branch
      %53 = sbr.rel (0) target = $region21
    $region20: #{tpu_custom_call.1} parent=1 // pred_region
      _
    $region21: #{tpu_custom_call.1} parent=1 // pred_fallthru
      _
    // Predicated region
    $region22: #{tpu_custom_call.1} parent=1 // pred_check
      _
    $region23: #{tpu_custom_call.1} parent=1 // pred_check_branch
      %55 = sbr.rel (0) target = $region25
    $region24: #{tpu_custom_call.1} parent=1 // pred_region
      %57 = dma.done [#allocation4], 32
    $region25: #{tpu_custom_call.1} parent=1 // pred_fallthru
      _
    // Predicated region
    $region26: #{tpu_custom_call.1} parent=1 // pred_check
      _
    $region27: #{tpu_custom_call.1} parent=1 // pred_check_branch
      %59 = sbr.rel (0) target = $region29
    $region28: #{tpu_custom_call.1} parent=1 // pred_region
      %61 = dma.done [#allocation7], 256
    $region29: #{tpu_custom_call.1} parent=1 // pred_fallthru
      _
    // Predicated region
    $region30: #{tpu_custom_call.1} parent=1 // pred_check
      _
    $region31: #{tpu_custom_call.1} parent=1 // pred_check_branch
      %63 = sbr.rel (0) target = $region33
    $region32: #{tpu_custom_call.1} parent=1 // pred_region
      %65 = dma.done [#allocation7], 256
    $region33: #{tpu_custom_call.1} parent=1 // pred_fallthru
      _
    %p67 = scmp.eq.s32.totalorder 0, 0
    // Predicated region
    $region34: #{tpu_custom_call.1} parent=1 // pred_check
      %p68 = pneg %p67
    $region35: #{tpu_custom_call.1} parent=1 // pred_check_branch
      %70 = sbr.rel (%p68) target = $region37
    $region36: #{tpu_custom_call.1} parent=1 // pred_region
      %v71 = vld [vmem:[#allocation3] sm:$0x3]
      %v72 = vpack.c.bf16 %v71, %v71
      %v73 = vld [vmem:[#allocation6] sm:$0xf]
      %v74 = vld [vmem:[#allocation6 + $0x4] sm:$0xf]
      %v75 = vld [vmem:[#allocation6 + $0x8] sm:$0xf]
      %v76 = vld [vmem:[#allocation6 + $0xc] sm:$0xf]
      %v77 = vld [vmem:[%s2] sm:$0x1]
      %v79 = vperm.slane %v77, 0
      %v85 = vunpack.c.l.b16 %v73
      %v86 = vunpack.c.l.b16 %v74
      %v87 = vunpack.c.l.b16 %v75
      %v88 = vunpack.c.l.b16 %v76
      %v89 = vpack.c.b16 %v86, %v85
      %v90 = vpack.c.b16 %v88, %v87
      %vm93 = vcmask 261120
      %v95 = vsel %vm93, %v72, 0
      %97 = vmatpush.bf16.msra.mxu0 0
      %98 = vmatpush.bf16.msra.mxu0 0
      %99 = vmatpush.bf16.msra.mxu0 0
      %100 = vmatpush.bf16.msra.mxu0 0
      %101 = vmatpush.bf16.msra.mxu0 0
      %102 = vmatpush.bf16.msra.mxu0 0
      %103 = vmatpush.bf16.msra.mxu0 %v90
      %104 = vmatpush.bf16.msra.mxu0 %v89
      %105 = vmatmul.bf16.gmra.mxu0 %v95
      %v106 = vpop.f32.mrf.mxu0
      %v107 = vadd.f32 %v79, %v106
      %v108 = vpop.f32.mrf.mxu0
      %109 = vdwg.mxu0
      %v110 = vmax.f32 %v107, 0.0
      %v111 = vpack.c.bf16 %v110, %v110
      %vm112 = vcmask 253952
      %113 = vst.msk [vmem:[#allocation2] sm:$0x1] %vm112, %v111
    $region37: #{tpu_custom_call.1} parent=1 // pred_fallthru
      _
    %v114 = vld [vmem:[#allocation2] sm:$0x1]
    %v115 = vld [vmem:[#allocation8] sm:$0xf]
    %v116 = vld [vmem:[#allocation8 + $0x4] sm:$0xf]
    %v117 = vld [vmem:[#allocation8 + $0x8] sm:$0xf]
    %v118 = vld [vmem:[#allocation8 + $0xc] sm:$0xf]
    %v119 = vld [vmem:[%s4] sm:$0x1]
    %v121 = vperm.slane %v119, 0
    %v127 = vunpack.c.l.b16 %v115
    %v128 = vunpack.c.l.b16 %v116
    %v129 = vunpack.c.l.b16 %v117
    %v130 = vunpack.c.l.b16 %v118
    %v131 = vpack.c.b16 %v128, %v127
    %v132 = vpack.c.b16 %v130, %v129
    %vm135 = vcmask 261120
    %v137 = vsel %vm135, %v114, 0
    %139 = vmatpush.bf16.msra.mxu0 0
    %140 = vmatpush.bf16.msra.mxu0 0
    %141 = vmatpush.bf16.msra.mxu0 0
    %142 = vmatpush.bf16.msra.mxu0 0
    %143 = vmatpush.bf16.msra.mxu0 0
    %144 = vmatpush.bf16.msra.mxu0 0
    %145 = vmatpush.bf16.msra.mxu0 %v132
    %146 = vmatpush.bf16.msra.mxu0 %v131
    %147 = vmatmul.bf16.gmra.mxu0 %v137
    %v148 = vpop.f32.mrf.mxu0
    %v149 = vadd.f32 %v121, %v148
    %v150 = vpop.f32.mrf.mxu0
    %151 = vdwg.mxu0
    %v152 = vpack.c.bf16 %v149, %v149
    %153 = vst [vmem:[#allocation9] sm:$0x1] %v152
    // Predicated region
    $region38: #{tpu_custom_call.1} parent=1 // pred_check
      _
    $region39: #{tpu_custom_call.1} parent=1 // pred_check_branch
      %155 = sbr.rel (0) target = $region41
    $region40: #{tpu_custom_call.1} parent=1 // pred_region
      %157 = vsyncadd [#allocation5], 0
      %s159 = sshll.u32 [#allocation9], 4
      %s160 = int_to_ptr.vmem [resolvable:$true] %s159
      %s161 = sshll.u32 %s5, 4
      %s162 = int_to_ptr.hbm [resolvable:$true] %s161
      %164 = dma.vmem_to_hbm [thread:$0]  %s160, 16, %s162, [#allocation5]
    $region41: #{tpu_custom_call.1} parent=1 // pred_fallthru
      _
    // Predicated region
    $region42: #{tpu_custom_call.1} parent=1 // pred_check
      _
    $region43: #{tpu_custom_call.1} parent=1 // pred_check_branch
      %166 = sbr.rel (0) target = $region45
    $region44: #{tpu_custom_call.1} parent=1 // pred_region
      %168 = dma.done [#allocation5], 16
    $region45: #{tpu_custom_call.1} parent=1 // pred_fallthru
      _
    %169 = vsyncpa [#allocation4], 1
    %170 = vsyncpa [#allocation7], 1
    %171 = vsyncpa [#allocation5], 1

// kernel: tpu_custom_call.1
$region0: #{tpu_custom_call.1}
  #allocation0 [shape = 'u32[]', space=smem, size = 0x4, offset = 0x4, fixed_abs, tag = 'smem constant byte address 0x4 - core index']
  #allocation1 [shape = 'u32[72,128]{1,0:T(1,128)}', space=vmem, size = 0x9000, scoped, tag = 'internal scratch']
  #allocation2 [shape = 'bf16[2,32]{1,0:T(2,128)(2,1)}', space=vmem, size = 0x200, scoped, tag = 'scratch operand']
  %s0 = inlined_call_operand.hbm [shape: f32[2,32], index: 0, kind: input, shape index: {}]
  %s1 = inlined_call_operand.hbm [shape: bf16[32,32], index: 1, kind: input, shape index: {}]
  %s2 = inlined_call_operand.vmem [shape: f32[1,32], index: 2, kind: input, shape index: {}]
  %s3 = inlined_call_operand.hbm [shape: bf16[32,128], index: 3, kind: input, shape index: {}]
  %s4 = inlined_call_operand.vmem [shape: f32[1,128], index: 4, kind: input, shape index: {}]
  %s5 = inlined_call_operand.hbm [shape: bf16[2,128], index: 5, kind: output, shape index: {}]
  %s6 = sld [smem:[#allocation0]]
  $region46: #{tpu_custom_call.1} parent=0
    _
  %s8 = ssub.s32 1, %s6
  %s9 = scalar_select 0, %s8, %s6
  $region1: #{tpu_custom_call.1} parent=0
    #allocation3 [shape = 'u8[1024]{0}', space=vmem, size = 0x400, scoped, tag = 'input window, operand 0, single buffered']
    #allocation4 [shape = 's32[1]{0}', space=sflag, size = 0x4, scoped, tag = 'scoped memory for tpu_custom_call.1']
    #allocation5 [shape = 's32[1]{0}', space=sflag, size = 0x4, scoped, tag = 'scoped memory for tpu_custom_call.1']
    #allocation6 [shape = 'u8[8192]{0}', space=vmem, size = 0x2000, scoped, tag = 'input window, operand 1, single buffered']
    #allocation7 [shape = 's32[1]{0}', space=sflag, size = 0x4, scoped, tag = 'scoped memory for tpu_custom_call.1']
    #allocation8 [shape = 'u8[8192]{0}', space=vmem, size = 0x2000, scoped, tag = 'input window, operand 3, single buffered']
    #allocation9 [shape = 'u8[512]{0}', space=vmem, size = 0x400, scoped, tag = 'output window, operand 0, single buffered']
    %10 = vsyncpa [#allocation4], 0
    %11 = vsyncpa [#allocation7], 0
    %12 = vsyncpa [#allocation5], 0
    // Predicated region
    $region2: #{tpu_custom_call.1} parent=1 // pred_check
      _
    $region3: #{tpu_custom_call.1} parent=1 // pred_check_branch
      %14 = sbr.rel (0) target = $region5
    $region4: #{tpu_custom_call.1} parent=1 // pred_region
      %16 = vsyncadd [#allocation4], 0
      %s18 = sshll.u32 %s0, 4
      %s19 = int_to_ptr.hbm [resolvable:$true] %s18
      %s20 = sshll.u32 [#allocation3], 4
      %s21 = int_to_ptr.vmem [resolvable:$true] %s20
      %23 = dma.hbm_to_vmem [thread:$0]  %s19, 32, %s21, [#allocation4]
    $region5: #{tpu_custom_call.1} parent=1 // pred_fallthru
      _
    // Predicated region
    $region6: #{tpu_custom_call.1} parent=1 // pred_check
      _
    $region7: #{tpu_custom_call.1} parent=1 // pred_check_branch
      %25 = sbr.rel (0) target = $region9
    $region8: #{tpu_custom_call.1} parent=1 // pred_region
      %27 = vsyncadd [#allocation7], 0
      %s28 = sshll.u32 %s1, 4
      %s29 = int_to_ptr.hbm [resolvable:$true] %s28
      %s30 = sshll.u32 [#allocation6], 4
      %s31 = int_to_ptr.vmem [resolvable:$true] %s30
      %36 = dma.hbm_to_vmem [thread:$0]  %s29, 256, %s31, [#allocation7], 64, 64, 4
    $region9: #{tpu_custom_call.1} parent=1 // pred_fallthru
      _
    // Predicated region
    $region10: #{tpu_custom_call.1} parent=1 // pred_check
      _
    $region11: #{tpu_custom_call.1} parent=1 // pred_check_branch
      %38 = sbr.rel (0) target = $region13
    $region12: #{tpu_custom_call.1} parent=1 // pred_region
      _
    $region13: #{tpu_custom_call.1} parent=1 // pred_fallthru
      _
    // Predicated region
    $region14: #{tpu_custom_call.1} parent=1 // pred_check
      _
    $region15: #{tpu_custom_call.1} parent=1 // pred_check_branch
      %40 = sbr.rel (0) target = $region17
    $region16: #{tpu_custom_call.1} parent=1 // pred_region
      %42 = vsyncadd [#allocation7], 0
      %s43 = sshll.u32 %s3, 4
      %s44 = int_to_ptr.hbm [resolvable:$true] %s43
      %s45 = sshll.u32 [#allocation8], 4
      %s46 = int_to_ptr.vmem [resolvable:$true] %s45
      %51 = dma.hbm_to_vmem [thread:$0]  %s44, 256, %s46, [#allocation7], 64, 64, 4
    $region17: #{tpu_custom_call.1} parent=1 // pred_fallthru
      _
    // Predicated region
    $region18: #{tpu_custom_call.1} parent=1 // pred_check
      _
    $region19: #{tpu_custom_call.1} parent=1 // pred_check_branch
      %53 = sbr.rel (0) target = $region21
    $region20: #{tpu_custom_call.1} parent=1 // pred_region
      _
    $region21: #{tpu_custom_call.1} parent=1 // pred_fallthru
      _
    // Predicated region
    $region22: #{tpu_custom_call.1} parent=1 // pred_check
      _
    $region23: #{tpu_custom_call.1} parent=1 // pred_check_branch
      %55 = sbr.rel (0) target = $region25
    $region24: #{tpu_custom_call.1} parent=1 // pred_region
      %57 = dma.done [#allocation4], 32
    $region25: #{tpu_custom_call.1} parent=1 // pred_fallthru
      _
    // Predicated region
    $region26: #{tpu_custom_call.1} parent=1 // pred_check
      _
    $region27: #{tpu_custom_call.1} parent=1 // pred_check_branch
      %59 = sbr.rel (0) target = $region29
    $region28: #{tpu_custom_call.1} parent=1 // pred_region
      %61 = dma.done [#allocation7], 256
    $region29: #{tpu_custom_call.1} parent=1 // pred_fallthru
      _
    // Predicated region
    $region30: #{tpu_custom_call.1} parent=1 // pred_check
      _
    $region31: #{tpu_custom_call.1} parent=1 // pred_check_branch
      %63 = sbr.rel (0) target = $region33
    $region32: #{tpu_custom_call.1} parent=1 // pred_region
      %65 = dma.done [#allocation7], 256
    $region33: #{tpu_custom_call.1} parent=1 // pred_fallthru
      _
    %p67 = scmp.eq.s32.totalorder 0, 0
    // Predicated region
    $region34: #{tpu_custom_call.1} parent=1 // pred_check
      %p68 = pneg %p67
    $region35: #{tpu_custom_call.1} parent=1 // pred_check_branch
      %70 = sbr.rel (%p68) target = $region37
    $region36: #{tpu_custom_call.1} parent=1 // pred_region
      %v71 = vld [vmem:[#allocation3] sm:$0x3]
      %v72 = vpack.c.bf16 %v71, %v71
      %v73 = vld [vmem:[#allocation6] sm:$0xf]
      %v74 = vld [vmem:[#allocation6 + $0x4] sm:$0xf]
      %v75 = vld [vmem:[#allocation6 + $0x8] sm:$0xf]
      %v76 = vld [vmem:[#allocation6 + $0xc] sm:$0xf]
      %v77 = vld [vmem:[%s2] sm:$0x1]
      %v79 = vperm.slane %v77, 0
      %v85 = vunpack.c.l.b16 %v73
      %v86 = vunpack.c.l.b16 %v74
      %v87 = vunpack.c.l.b16 %v75
      %v88 = vunpack.c.l.b16 %v76
      %v89 = vpack.c.b16 %v86, %v85
      %v90 = vpack.c.b16 %v88, %v87
      %vm93 = vcmask 261120
      %v95 = vsel %vm93, %v72, 0
      %97 = vmatpush.bf16.msra.mxu0 0
      %98 = vmatpush.bf16.msra.mxu0 0
      %99 = vmatpush.bf16.msra.mxu0 0
      %100 = vmatpush.bf16.msra.mxu0 0
      %101 = vmatpush.bf16.msra.mxu0 0
      %102 = vmatpush.bf16.msra.mxu0 0
      %103 = vmatpush.bf16.msra.mxu0 %v90
      %104 = vmatpush.bf16.msra.mxu0 %v89
      %105 = vmatmul.bf16.gmra.mxu0 %v95
      %v106 = vpop.f32.mrf.mxu0
      %v107 = vadd.f32 %v79, %v106
      %v108 = vpop.f32.mrf.mxu0
      %109 = vdwg.mxu0
      %v110 = vmax.f32 %v107, 0.0
      %v111 = vpack.c.bf16 %v110, %v110
      %vm112 = vcmask 253952
      %113 = vst.msk [vmem:[#allocation2] sm:$0x1] %vm112, %v111
    $region37: #{tpu_custom_call.1} parent=1 // pred_fallthru
      _
    %v114 = vld [vmem:[#allocation2] sm:$0x1]
    %v115 = vld [vmem:[#allocation8] sm:$0xf]
    %v116 = vld [vmem:[#allocation8 + $0x4] sm:$0xf]
    %v117 = vld [vmem:[#allocation8 + $0x8] sm:$0xf]
    %v118 = vld [vmem:[#allocation8 + $0xc] sm:$0xf]
    %v119 = vld [vmem:[%s4] sm:$0x1]
    %v121 = vperm.slane %v119, 0
    %v127 = vunpack.c.l.b16 %v115
    %v128 = vunpack.c.l.b16 %v116
    %v129 = vunpack.c.l.b16 %v117
    %v130 = vunpack.c.l.b16 %v118
    %v131 = vpack.c.b16 %v128, %v127
    %v132 = vpack.c.b16 %v130, %v129
    %vm135 = vcmask 261120
    %v137 = vsel %vm135, %v114, 0
    %139 = vmatpush.bf16.msra.mxu0 0
    %140 = vmatpush.bf16.msra.mxu0 0
    %141 = vmatpush.bf16.msra.mxu0 0
    %142 = vmatpush.bf16.msra.mxu0 0
    %143 = vmatpush.bf16.msra.mxu0 0
    %144 = vmatpush.bf16.msra.mxu0 0
    %145 = vmatpush.bf16.msra.mxu0 %v132
    %146 = vmatpush.bf16.msra.mxu0 %v131
    %147 = vmatmul.bf16.gmra.mxu0 %v137
    %v148 = vpop.f32.mrf.mxu0
    %v149 = vadd.f32 %v121, %v148
    %v150 = vpop.f32.mrf.mxu0
    %151 = vdwg.mxu0
    %v152 = vpack.c.bf16 %v149, %v149
    %153 = vst [vmem:[#allocation9] sm:$0x1] %v152
    // Predicated region
    $region38: #{tpu_custom_call.1} parent=1 // pred_check
      _
    $region39: #{tpu_custom_call.1} parent=1 // pred_check_branch
      %155 = sbr.rel (0) target = $region41
    $region40: #{tpu_custom_call.1} parent=1 // pred_region
      %157 = vsyncadd [#allocation5], 0
      %s159 = sshll.u32 [#allocation9], 4
      %s160 = int_to_ptr.vmem [resolvable:$true] %s159
      %s161 = sshll.u32 %s5, 4
      %s162 = int_to_ptr.hbm [resolvable:$true] %s161
      %164 = dma.vmem_to_hbm [thread:$0]  %s160, 16, %s162, [#allocation5]
    $region41: #{tpu_custom_call.1} parent=1 // pred_fallthru
      _
    // Predicated region
    $region42: #{tpu_custom_call.1} parent=1 // pred_check
      _
    $region43: #{tpu_custom_call.1} parent=1 // pred_check_branch
      %166 = sbr.rel (0) target = $region45
    $region44: #{tpu_custom_call.1} parent=1 // pred_region
      %168 = dma.done [#allocation5], 16
    $region45: #{tpu_custom_call.1} parent=1 // pred_fallthru
      _
    %169 = vsyncpa [#allocation4], 1
    %170 = vsyncpa [#allocation7], 1
    %171 = vsyncpa [#allocation5], 1

</llo_original>
